<compile_context>
chip_gen: v7x
topology: tpu7x:2x2x1
jax: 0.10.0
libtpu: 0.0.40
codegen_flags: <defaults>
</compile_context>

<pallas_src>
import functools

import jax
import jax.numpy as jnp
from jax.experimental import pallas as pl
from jax.experimental.pallas import tpu as pltpu


def _ceil_to(x, m):
    return -(-x // m) * m


def vap_kernel(x_ref, w1_ref, w2t_ref, wfc_ref, bfc_ref, out_ref, *,
               vap_level, feature_dim):
    # x_ref:   (bb, T*D)  input dtype, time folded into lanes
    # w1_ref:  (L, 4L)    TES first linear, (in, out) layout
    # w2t_ref: (L, 4L)    TES second linear transposed: row j = W2[:, j]
    # wfc_ref: (D, Cp)    classifier weight, Cp = pad(num_class, 128)
    # bfc_ref: (1, Cp)
    # out_ref: (bb, Cp)   f32
    L = vap_level
    D = feature_dim
    x = x_ref[...]
    T = x.shape[1] // D

    # ---- shared log-depth max pyramid over time (lane-aligned full-vreg maxes) ----
    # After folding to width g*D: slab[b, j*D + d] = max_k x[b, (k*g + j)*D + d],
    # i.e. exactly the dilation-g MaxPool1d outputs (level i = log2(g)).
    ys = [None] * L
    m = x
    g = T
    while g > 1:
        g //= 2
        m = jnp.maximum(m[:, :g * D], m[:, g * D:])              # (bb, g*D)
        # temporal mean (AdaptiveAvgPool1d(1)): lane-halving add tree in f32
        s = m.astype(jnp.float32)
        h = g
        while h > 1:
            h //= 2
            s = s[:, :h * D] + s[:, h * D:]
        ys[g.bit_length() - 1] = s * (1.0 / g)                   # (bb, D) f32

    # ---- w = AdaptiveMaxPool1d(1) over features: one lane reduce per level ----
    w_cols = [jnp.max(ys[i], axis=1, keepdims=True) for i in range(L)]  # (bb, 1)

    # ---- TES MLP on the VPU (unrolled broadcast FMAs; MXU stays free for fc) ----
    w1 = w1_ref[...].astype(jnp.float32)                         # (L, 4L)
    w2t = w2t_ref[...].astype(jnp.float32)                       # (L, 4L)
    hid = w_cols[0] * w1[0:1, :]
    for i in range(1, L):
        hid = hid + w_cols[i] * w1[i:i + 1, :]
    hid = jnp.maximum(hid, 0.0)                                  # (bb, 4L)

    e_cols = []
    for j in range(L):
        s_j = jnp.sum(hid * w2t[j:j + 1, :], axis=1, keepdims=True)   # (bb, 1)
        e_cols.append(jnp.exp(jax.nn.sigmoid(s_j)))
    denom = e_cols[0]
    for j in range(1, L):
        denom = denom + e_cols[j]
    inv = 1.0 / denom                                            # exact divide (accuracy)

    # ---- level-weighted sum of per-level features -> (bb, D) f32 ----
    feat = ys[0] * (e_cols[0] * inv)
    for i in range(1, L):
        feat = feat + ys[i] * (e_cols[i] * inv)

    # ---- dropout (identity, eval) + fc on the MXU ----
    # TODO(synk): dropout is a no-op here (eval-mode forward).
    out = jnp.dot(feat, wfc_ref[...], preferred_element_type=jnp.float32)
    out_ref[...] = (out + bfc_ref[...]).astype(out_ref.dtype)


def _tpu_info():
    """(vmem_capacity_bytes, tensorcores_per_chip) with conservative fallbacks."""
    vmem = 64 * 1024 * 1024                       # safe across v5e/v6e/v7x
    try:
        vmem = int(pltpu.get_tpu_info().vmem_capacity_bytes)
    except Exception:
        pass
    cores = 1
    try:
        kind = jax.devices()[0].device_kind.lower()
        if "7" in kind:                           # v7x: 2 TensorCores per chip
            cores = 2
    except Exception:
        pass
    # Guard against per-chip vs per-core reporting ambiguity.
    vmem = min(vmem, (64 if cores >= 2 else 128) * 1024 * 1024)
    vmem = max(vmem, 16 * 1024 * 1024)
    return vmem, cores


def _choose_block_batch(B, T, D, itemsize, L, Cp, vmem_bytes, cores):
    """Rows per grid step, from an explicit generation-aware VMEM budget."""
    # Per-row VMEM: 2x double-buffered x tile + f32 pyramid temporaries
    # (<= T*D f32) + per-level features & feat + 2x out tile.
    per_row = 2 * T * D * itemsize + T * D * 4 + (L + 2) * D * 4 + 2 * Cp * 4
    budget = max(int(vmem_bytes * 0.55), 2 << 20)
    bb_max = max(8, min(2048, (budget // per_row) // 8 * 8))

    B8 = _ceil_to(B, 8)
    bb_max = min(bb_max, B8)
    nsteps = -(-B8 // bb_max)                     # minimum steps VMEM allows
    if cores >= 2 and B8 >= 16:
        # v7x: even number of "parallel" steps so both TensorCores get balanced
        # work -- but never shrink the x tile below ~2 MiB (DMA efficiency).
        floor_rows = max(8, ((2 << 20) // max(T * D * itemsize, 1)) // 8 * 8)
        even_steps = max(2, nsteps + (nsteps % 2))
        if _ceil_to(-(-B8 // even_steps), 8) >= floor_rows:
            nsteps = even_steps
    # Single-TC chips (v5e/v6e) keep one maximal block / minimum step count.
    return _ceil_to(-(-B8 // nsteps), 8)


def vap_forward(x2d, w1, w2, wfc, bfc, *, n_segment):
    """x2d: (B*n_segment, D), same layout as the PyTorch module. Returns (B, C) f32."""
    NT, D = x2d.shape
    assert NT % n_segment == 0, "batch*time must be divisible by n_segment"
    B = NT // n_segment
    T = n_segment
    L = T.bit_length() - 1
    assert T == (1 << L) and L >= 1, "n_segment must be a power of two >= 2"
    assert D % 128 == 0, "feature_dim must be a multiple of 128 (lane-flattened pyramid)"
    C = wfc.shape[1]

    x = x2d.reshape(B, T * D)          # free row-major reshape: time folded into lanes
    w2t = w2.T                         # (L, 4L): row j of w2t == column j of W2

    vmem_cap, cores = _tpu_info()
    itemsize = jnp.dtype(x.dtype).itemsize
    Cp = _ceil_to(C, 128)              # lane-dense classifier output
    bb = _choose_block_batch(B, T, D, itemsize, L, Cp, vmem_cap, cores)
    Bp = _ceil_to(B, bb)

    if Bp != B:
        x = jnp.pad(x, ((0, Bp - B), (0, 0)))      # padded rows sliced off below
    if Cp != C:
        wfc = jnp.pad(wfc, ((0, 0), (0, Cp - C)))
        bfc = jnp.pad(bfc, ((0, 0), (0, Cp - C)))

    kernel = functools.partial(vap_kernel, vap_level=L, feature_dim=D)
    cost = pl.CostEstimate(
        flops=int(2 * Bp * D * Cp + 2 * Bp * T * D),
        transcendentals=int(3 * L * Bp),
        bytes_accessed=int(Bp * T * D * itemsize + Bp * Cp * 4
                           + D * Cp * jnp.dtype(wfc.dtype).itemsize),
    )
    cparams = pltpu.CompilerParams(
        dimension_semantics=("parallel",),
        vmem_limit_bytes=int(vmem_cap * 0.85),
    )

    def run(single_buffer_weights):
        def const_spec(shape):
            if single_buffer_weights:
                # Constant index map -> loaded once; Buffered(1) avoids reserving
                # a dead second VMEM buffer per weight.
                return pl.BlockSpec(shape, lambda i: (0, 0),
                                    pipeline_mode=pl.Buffered(1))
            return pl.BlockSpec(shape, lambda i: (0, 0))

        return pl.pallas_call(
            kernel,
            out_shape=jax.ShapeDtypeStruct((Bp, Cp), jnp.float32),
            grid=(Bp // bb,),
            in_specs=[
                pl.BlockSpec((bb, T * D), lambda i: (i, 0)),
                const_spec(w1.shape),
                const_spec(w2t.shape),
                const_spec(wfc.shape),
                const_spec(bfc.shape),
            ],
            out_specs=pl.BlockSpec((bb, Cp), lambda i: (i, 0)),
            compiler_params=cparams,
            cost_estimate=cost,
        )(x, w1, w2t, wfc, bfc)

    try:
        out = run(single_buffer_weights=True)
    except Exception:                  # pl.Buffered(1) unsupported -> default buffering
        out = run(single_buffer_weights=False)
    return out[:B, :C]


def vap_reference(x2d, w1, w2, wfc, bfc, *, n_segment):
    """Pure-JAX reference mirroring the PyTorch forward."""
    NT, D = x2d.shape
    B = NT // n_segment
    L = n_segment.bit_length() - 1
    x = x2d.reshape(B, n_segment, D)
    ys = []
    for i in range(L):
        ts = 2 ** i
        xr = x.reshape(B, n_segment // ts, ts, D)            # [b,k,j,d] = x[b, k*ts+j, d]
        ys.append(jnp.mean(jnp.max(xr, axis=1), axis=1))      # (B, D)
    y = jnp.stack(ys, axis=1)                                 # (B, L, D)
    w = jnp.max(y, axis=2)                                    # (B, L)
    h = jax.nn.relu(w @ w1)                                   # (B, 4L)
    s = jax.nn.sigmoid(h @ w2)                                # (B, L)
    a = jax.nn.softmax(s, axis=1)
    feat = jnp.sum(y * a[:, :, None], axis=1)                 # (B, D)
    return feat @ wfc + bfc


if __name__ == "__main__":
    # Small shapes consistent with the module: n_segment=8 -> 3-level VAP.
    B, n_segment, feature_dim, num_class = 16, 8, 256, 16
    vap_level = n_segment.bit_length() - 1

    key = jax.random.PRNGKey(0)
    kx, k1, k2, k3 = jax.random.split(key, 4)

    # Input: (B*n_segment, feature_dim), matching the PyTorch module's 2-D input.
    x2d = jax.random.normal(kx, (B * n_segment, feature_dim), jnp.float32)

    # Parameters: nn.init.normal_(weight, 0, 0.001); biases = 0.
    # TES linears have no bias; fc has a (zero-init) bias.
    w1 = 0.001 * jax.random.normal(k1, (vap_level, 4 * vap_level), jnp.float32)   # Linear(L,4L)^T
    w2 = 0.001 * jax.random.normal(k2, (4 * vap_level, vap_level), jnp.float32)   # Linear(4L,L)^T
    wfc = 0.001 * jax.random.normal(k3, (feature_dim, num_class), jnp.float32)    # Linear(D,C)^T
    bfc = jnp.zeros((1, num_class), jnp.float32)

    out = vap_forward(x2d, w1, w2, wfc, bfc, n_segment=n_segment)
    out = jax.block_until_ready(out)

    ref = vap_reference(x2d, w1, w2, wfc, bfc, n_segment=n_segment)
    if not jnp.allclose(out, ref, atol=1e-4, rtol=1e-4):
        err = float(jnp.max(jnp.abs(out - ref)))
        raise AssertionError(f"Pallas VAP kernel mismatch vs. reference (max abs err {err:.3e})")

    print("KERNEL_OK")
</pallas_src>

<mosaic_0001>
module attributes {stable_mosaic.version = 11 : i64} {
  func.func @vap_kernel(%arg0: i32, %arg1: memref<16x2048xf32, #tpu.memory_space<vmem>>, %arg2: memref<3x12xf32, #tpu.memory_space<vmem>>, %arg3: memref<3x12xf32, #tpu.memory_space<vmem>>, %arg4: memref<256x128xf32, #tpu.memory_space<vmem>>, %arg5: memref<1x128xf32, #tpu.memory_space<vmem>>, %arg6: memref<16x128xf32, #tpu.memory_space<vmem>>) attributes {dimension_semantics = [#tpu.dimension_semantics<parallel>], iteration_bounds = array<i64: 1>, scalar_prefetch = 0 : i64, scratch_operands = 0 : i64, tpu.core_type = #tpu.core_type<tc>, window_params = [{transform_indices = @transform_0, window_bounds = array<i64: 16, 2048>}, {pipeline_mode = #tpu.pipeline_mode<synchronous>, transform_indices = @transform_1, window_bounds = array<i64: 3, 12>}, {pipeline_mode = #tpu.pipeline_mode<synchronous>, transform_indices = @transform_2, window_bounds = array<i64: 3, 12>}, {pipeline_mode = #tpu.pipeline_mode<synchronous>, transform_indices = @transform_3, window_bounds = array<i64: 256, 128>}, {pipeline_mode = #tpu.pipeline_mode<synchronous>, transform_indices = @transform_4, window_bounds = array<i64: 1, 128>}, {transform_indices = @transform_5, window_bounds = array<i64: 16, 128>}]} {
    %c0 = arith.constant 0 : index
    %c0_0 = arith.constant 0 : index
    %0 = vector.load %arg1[%c0, %c0_0] : memref<16x2048xf32, #tpu.memory_space<vmem>>, vector<16x2048xf32>
    %1 = vector.extract_strided_slice %0 {offsets = [0, 0], sizes = [16, 1024], strides = [1, 1]} : vector<16x2048xf32> to vector<16x1024xf32>
    %2 = vector.extract_strided_slice %0 {offsets = [0, 1024], sizes = [16, 1024], strides = [1, 1]} : vector<16x2048xf32> to vector<16x1024xf32>
    %3 = arith.maximumf %1, %2 : vector<16x1024xf32>
    %4 = vector.extract_strided_slice %3 {offsets = [0, 0], sizes = [16, 512], strides = [1, 1]} : vector<16x1024xf32> to vector<16x512xf32>
    %5 = vector.extract_strided_slice %3 {offsets = [0, 512], sizes = [16, 512], strides = [1, 1]} : vector<16x1024xf32> to vector<16x512xf32>
    %6 = arith.addf %4, %5 : vector<16x512xf32>
    %7 = vector.extract_strided_slice %6 {offsets = [0, 0], sizes = [16, 256], strides = [1, 1]} : vector<16x512xf32> to vector<16x256xf32>
    %8 = vector.extract_strided_slice %6 {offsets = [0, 256], sizes = [16, 256], strides = [1, 1]} : vector<16x512xf32> to vector<16x256xf32>
    %9 = arith.addf %7, %8 : vector<16x256xf32>
    %cst = arith.constant 2.500000e-01 : f32
    %10 = vector.broadcast %cst : f32 to vector<16x256xf32>
    %11 = arith.mulf %9, %10 : vector<16x256xf32>
    %12 = vector.extract_strided_slice %3 {offsets = [0, 0], sizes = [16, 512], strides = [1, 1]} : vector<16x1024xf32> to vector<16x512xf32>
    %13 = vector.extract_strided_slice %3 {offsets = [0, 512], sizes = [16, 512], strides = [1, 1]} : vector<16x1024xf32> to vector<16x512xf32>
    %14 = arith.maximumf %12, %13 : vector<16x512xf32>
    %15 = vector.extract_strided_slice %14 {offsets = [0, 0], sizes = [16, 256], strides = [1, 1]} : vector<16x512xf32> to vector<16x256xf32>
    %16 = vector.extract_strided_slice %14 {offsets = [0, 256], sizes = [16, 256], strides = [1, 1]} : vector<16x512xf32> to vector<16x256xf32>
    %17 = arith.addf %15, %16 : vector<16x256xf32>
    %cst_1 = arith.constant 5.000000e-01 : f32
    %18 = vector.broadcast %cst_1 : f32 to vector<16x256xf32>
    %19 = arith.mulf %17, %18 : vector<16x256xf32>
    %20 = vector.extract_strided_slice %14 {offsets = [0, 0], sizes = [16, 256], strides = [1, 1]} : vector<16x512xf32> to vector<16x256xf32>
    %21 = vector.extract_strided_slice %14 {offsets = [0, 256], sizes = [16, 256], strides = [1, 1]} : vector<16x512xf32> to vector<16x256xf32>
    %22 = arith.maximumf %20, %21 : vector<16x256xf32>
    %cst_2 = arith.constant 1.000000e+00 : f32
    %23 = vector.broadcast %cst_2 : f32 to vector<16x256xf32>
    %24 = arith.mulf %22, %23 : vector<16x256xf32>
    %cst_3 = arith.constant dense<0xFF800000> : vector<16xf32>
    %25 = vector.multi_reduction <maximumf>, %24, %cst_3 [1] : vector<16x256xf32> to vector<16xf32>
    %26 = vector.shape_cast %25 : vector<16xf32> to vector<16x1xf32>
    %cst_4 = arith.constant dense<0xFF800000> : vector<16xf32>
    %27 = vector.multi_reduction <maximumf>, %19, %cst_4 [1] : vector<16x256xf32> to vector<16xf32>
    %28 = vector.shape_cast %27 : vector<16xf32> to vector<16x1xf32>
    %cst_5 = arith.constant dense<0xFF800000> : vector<16xf32>
    %29 = vector.multi_reduction <maximumf>, %11, %cst_5 [1] : vector<16x256xf32> to vector<16xf32>
    %30 = vector.shape_cast %29 : vector<16xf32> to vector<16x1xf32>
    %c0_6 = arith.constant 0 : index
    %c0_7 = arith.constant 0 : index
    %31 = vector.load %arg2[%c0_6, %c0_7] : memref<3x12xf32, #tpu.memory_space<vmem>>, vector<3x12xf32>
    %c0_8 = arith.constant 0 : index
    %c0_9 = arith.constant 0 : index
    %32 = vector.load %arg3[%c0_8, %c0_9] : memref<3x12xf32, #tpu.memory_space<vmem>>, vector<3x12xf32>
    %33 = vector.extract_strided_slice %31 {offsets = [0, 0], sizes = [1, 12], strides = [1, 1]} : vector<3x12xf32> to vector<1x12xf32>
    %34 = vector.broadcast %26 : vector<16x1xf32> to vector<16x12xf32>
    %35 = vector.broadcast %33 : vector<1x12xf32> to vector<16x12xf32>
    %36 = arith.mulf %34, %35 : vector<16x12xf32>
    %37 = vector.extract_strided_slice %31 {offsets = [1, 0], sizes = [1, 12], strides = [1, 1]} : vector<3x12xf32> to vector<1x12xf32>
    %38 = vector.broadcast %28 : vector<16x1xf32> to vector<16x12xf32>
    %39 = vector.broadcast %37 : vector<1x12xf32> to vector<16x12xf32>
    %40 = arith.mulf %38, %39 : vector<16x12xf32>
    %41 = arith.addf %36, %40 : vector<16x12xf32>
    %42 = vector.extract_strided_slice %31 {offsets = [2, 0], sizes = [1, 12], strides = [1, 1]} : vector<3x12xf32> to vector<1x12xf32>
    %43 = vector.broadcast %30 : vector<16x1xf32> to vector<16x12xf32>
    %44 = vector.broadcast %42 : vector<1x12xf32> to vector<16x12xf32>
    %45 = arith.mulf %43, %44 : vector<16x12xf32>
    %46 = arith.addf %41, %45 : vector<16x12xf32>
    %cst_10 = arith.constant 0.000000e+00 : f32
    %47 = vector.broadcast %cst_10 : f32 to vector<16x12xf32>
    %48 = arith.maximumf %46, %47 : vector<16x12xf32>
    %49 = vector.extract_strided_slice %32 {offsets = [0, 0], sizes = [1, 12], strides = [1, 1]} : vector<3x12xf32> to vector<1x12xf32>
    %50 = vector.broadcast %49 : vector<1x12xf32> to vector<16x12xf32>
    %51 = arith.mulf %48, %50 : vector<16x12xf32>
    %cst_11 = arith.constant dense<0.000000e+00> : vector<16xf32>
    %52 = vector.multi_reduction <add>, %51, %cst_11 [1] : vector<16x12xf32> to vector<16xf32>
    %53 = vector.shape_cast %52 : vector<16xf32> to vector<16x1xf32>
    %54 = arith.negf %53 : vector<16x1xf32>
    %55 = math.exp %54 : vector<16x1xf32>
    %cst_12 = arith.constant 1.000000e+00 : f32
    %56 = vector.broadcast %cst_12 : f32 to vector<16x1xf32>
    %57 = arith.addf %56, %55 : vector<16x1xf32>
    %58 = arith.divf %56, %57 : vector<16x1xf32>
    %59 = math.exp %58 : vector<16x1xf32>
    %60 = vector.extract_strided_slice %32 {offsets = [1, 0], sizes = [1, 12], strides = [1, 1]} : vector<3x12xf32> to vector<1x12xf32>
    %61 = vector.broadcast %60 : vector<1x12xf32> to vector<16x12xf32>
    %62 = arith.mulf %48, %61 : vector<16x12xf32>
    %cst_13 = arith.constant dense<0.000000e+00> : vector<16xf32>
    %63 = vector.multi_reduction <add>, %62, %cst_13 [1] : vector<16x12xf32> to vector<16xf32>
    %64 = vector.shape_cast %63 : vector<16xf32> to vector<16x1xf32>
    %65 = arith.negf %64 : vector<16x1xf32>
    %66 = math.exp %65 : vector<16x1xf32>
    %cst_14 = arith.constant 1.000000e+00 : f32
    %67 = vector.broadcast %cst_14 : f32 to vector<16x1xf32>
    %68 = arith.addf %67, %66 : vector<16x1xf32>
    %69 = arith.divf %67, %68 : vector<16x1xf32>
    %70 = math.exp %69 : vector<16x1xf32>
    %71 = vector.extract_strided_slice %32 {offsets = [2, 0], sizes = [1, 12], strides = [1, 1]} : vector<3x12xf32> to vector<1x12xf32>
    %72 = vector.broadcast %71 : vector<1x12xf32> to vector<16x12xf32>
    %73 = arith.mulf %48, %72 : vector<16x12xf32>
    %cst_15 = arith.constant dense<0.000000e+00> : vector<16xf32>
    %74 = vector.multi_reduction <add>, %73, %cst_15 [1] : vector<16x12xf32> to vector<16xf32>
    %75 = vector.shape_cast %74 : vector<16xf32> to vector<16x1xf32>
    %76 = arith.negf %75 : vector<16x1xf32>
    %77 = math.exp %76 : vector<16x1xf32>
    %cst_16 = arith.constant 1.000000e+00 : f32
    %78 = vector.broadcast %cst_16 : f32 to vector<16x1xf32>
    %79 = arith.addf %78, %77 : vector<16x1xf32>
    %80 = arith.divf %78, %79 : vector<16x1xf32>
    %81 = math.exp %80 : vector<16x1xf32>
    %82 = arith.addf %59, %70 : vector<16x1xf32>
    %83 = arith.addf %82, %81 : vector<16x1xf32>
    %cst_17 = arith.constant 1.000000e+00 : f32
    %84 = vector.broadcast %cst_17 : f32 to vector<16x1xf32>
    %85 = arith.divf %84, %83 : vector<16x1xf32>
    %86 = arith.mulf %59, %85 : vector<16x1xf32>
    %87 = vector.broadcast %86 : vector<16x1xf32> to vector<16x256xf32>
    %88 = arith.mulf %24, %87 : vector<16x256xf32>
    %89 = arith.mulf %70, %85 : vector<16x1xf32>
    %90 = vector.broadcast %89 : vector<16x1xf32> to vector<16x256xf32>
    %91 = arith.mulf %19, %90 : vector<16x256xf32>
    %92 = arith.addf %88, %91 : vector<16x256xf32>
    %93 = arith.mulf %81, %85 : vector<16x1xf32>
    %94 = vector.broadcast %93 : vector<16x1xf32> to vector<16x256xf32>
    %95 = arith.mulf %11, %94 : vector<16x256xf32>
    %96 = arith.addf %92, %95 : vector<16x256xf32>
    %c0_18 = arith.constant 0 : index
    %c0_19 = arith.constant 0 : index
    %97 = vector.load %arg4[%c0_18, %c0_19] : memref<256x128xf32, #tpu.memory_space<vmem>>, vector<256x128xf32>
    %cst_20 = arith.constant dense<0.000000e+00> : vector<16x128xf32>
    %98 = tpu.matmul %96, %97, %cst_20 {dimension_numbers = #tpu.dot_dimension_numbers<[1], [0], [0], [1], [0, 0, 1, 1], [], []>} : vector<16x256xf32>, vector<256x128xf32>, vector<16x128xf32> -> vector<16x128xf32>
    %c0_21 = arith.constant 0 : index
    %c0_22 = arith.constant 0 : index
    %99 = vector.load %arg5[%c0_21, %c0_22] : memref<1x128xf32, #tpu.memory_space<vmem>>, vector<1x128xf32>
    %100 = vector.broadcast %99 : vector<1x128xf32> to vector<16x128xf32>
    %101 = arith.addf %98, %100 : vector<16x128xf32>
    %c0_23 = arith.constant 0 : index
    %c0_24 = arith.constant 0 : index
    %102 = vector.load %arg6[%c0_23, %c0_24] : memref<16x128xf32, #tpu.memory_space<vmem>>, vector<16x128xf32>
    tpu.vector_store %arg6[%c0_23, %c0_24], %101 {strides = array<i32>} : memref<16x128xf32, #tpu.memory_space<vmem>>, vector<16x128xf32>,
    return
  }
  func.func @transform_0(%arg0: i32) -> (i32, i32) {
    %c0_i32 = arith.constant 0 : i32
    %c0_i32_0 = arith.constant 0 : i32
    return %arg0, %c0_i32 : i32, i32
  }
  func.func @transform_1(%arg0: i32) -> (i32, i32) {
    %c0_i32 = arith.constant 0 : i32
    %c0_i32_0 = arith.constant 0 : i32
    %c0_i32_1 = arith.constant 0 : i32
    return %c0_i32, %c0_i32_0 : i32, i32
  }
  func.func @transform_2(%arg0: i32) -> (i32, i32) {
    %c0_i32 = arith.constant 0 : i32
    %c0_i32_0 = arith.constant 0 : i32
    %c0_i32_1 = arith.constant 0 : i32
    return %c0_i32, %c0_i32_0 : i32, i32
  }
  func.func @transform_3(%arg0: i32) -> (i32, i32) {
    %c0_i32 = arith.constant 0 : i32
    %c0_i32_0 = arith.constant 0 : i32
    %c0_i32_1 = arith.constant 0 : i32
    return %c0_i32, %c0_i32_0 : i32, i32
  }
  func.func @transform_4(%arg0: i32) -> (i32, i32) {
    %c0_i32 = arith.constant 0 : i32
    %c0_i32_0 = arith.constant 0 : i32
    %c0_i32_1 = arith.constant 0 : i32
    return %c0_i32, %c0_i32_0 : i32, i32
  }
  func.func @transform_5(%arg0: i32) -> (i32, i32) {
    %c0_i32 = arith.constant 0 : i32
    %c0_i32_0 = arith.constant 0 : i32
    return %arg0, %c0_i32 : i32, i32
  }
}

module attributes {stable_mosaic.version = 11 : i64} {
  func.func @vap_kernel(%arg0: i32, %arg1: memref<16x2048xf32, #tpu.memory_space<vmem>>, %arg2: memref<3x12xf32, #tpu.memory_space<vmem>>, %arg3: memref<3x12xf32, #tpu.memory_space<vmem>>, %arg4: memref<256x128xf32, #tpu.memory_space<vmem>>, %arg5: memref<1x128xf32, #tpu.memory_space<vmem>>, %arg6: memref<16x128xf32, #tpu.memory_space<vmem>>) attributes {dimension_semantics = [#tpu.dimension_semantics<parallel>], iteration_bounds = array<i64: 1>, scalar_prefetch = 0 : i64, scratch_operands = 0 : i64, tpu.core_type = #tpu.core_type<tc>, window_params = [{transform_indices = @transform_0, window_bounds = array<i64: 16, 2048>}, {pipeline_mode = #tpu.pipeline_mode<synchronous>, transform_indices = @transform_1, window_bounds = array<i64: 3, 12>}, {pipeline_mode = #tpu.pipeline_mode<synchronous>, transform_indices = @transform_2, window_bounds = array<i64: 3, 12>}, {pipeline_mode = #tpu.pipeline_mode<synchronous>, transform_indices = @transform_3, window_bounds = array<i64: 256, 128>}, {pipeline_mode = #tpu.pipeline_mode<synchronous>, transform_indices = @transform_4, window_bounds = array<i64: 1, 128>}, {transform_indices = @transform_5, window_bounds = array<i64: 16, 128>}]} {
    %c0 = arith.constant 0 : index
    %c0_0 = arith.constant 0 : index
    %0 = vector.load %arg1[%c0, %c0_0] : memref<16x2048xf32, #tpu.memory_space<vmem>>, vector<16x2048xf32>
    %1 = vector.extract_strided_slice %0 {offsets = [0, 0], sizes = [16, 1024], strides = [1, 1]} : vector<16x2048xf32> to vector<16x1024xf32>
    %2 = vector.extract_strided_slice %0 {offsets = [0, 1024], sizes = [16, 1024], strides = [1, 1]} : vector<16x2048xf32> to vector<16x1024xf32>
    %3 = arith.maximumf %1, %2 : vector<16x1024xf32>
    %4 = vector.extract_strided_slice %3 {offsets = [0, 0], sizes = [16, 512], strides = [1, 1]} : vector<16x1024xf32> to vector<16x512xf32>
    %5 = vector.extract_strided_slice %3 {offsets = [0, 512], sizes = [16, 512], strides = [1, 1]} : vector<16x1024xf32> to vector<16x512xf32>
    %6 = arith.addf %4, %5 : vector<16x512xf32>
    %7 = vector.extract_strided_slice %6 {offsets = [0, 0], sizes = [16, 256], strides = [1, 1]} : vector<16x512xf32> to vector<16x256xf32>
    %8 = vector.extract_strided_slice %6 {offsets = [0, 256], sizes = [16, 256], strides = [1, 1]} : vector<16x512xf32> to vector<16x256xf32>
    %9 = arith.addf %7, %8 : vector<16x256xf32>
    %cst = arith.constant 2.500000e-01 : f32
    %10 = vector.broadcast %cst : f32 to vector<16x256xf32>
    %11 = arith.mulf %9, %10 : vector<16x256xf32>
    %12 = vector.extract_strided_slice %3 {offsets = [0, 0], sizes = [16, 512], strides = [1, 1]} : vector<16x1024xf32> to vector<16x512xf32>
    %13 = vector.extract_strided_slice %3 {offsets = [0, 512], sizes = [16, 512], strides = [1, 1]} : vector<16x1024xf32> to vector<16x512xf32>
    %14 = arith.maximumf %12, %13 : vector<16x512xf32>
    %15 = vector.extract_strided_slice %14 {offsets = [0, 0], sizes = [16, 256], strides = [1, 1]} : vector<16x512xf32> to vector<16x256xf32>
    %16 = vector.extract_strided_slice %14 {offsets = [0, 256], sizes = [16, 256], strides = [1, 1]} : vector<16x512xf32> to vector<16x256xf32>
    %17 = arith.addf %15, %16 : vector<16x256xf32>
    %cst_1 = arith.constant 5.000000e-01 : f32
    %18 = vector.broadcast %cst_1 : f32 to vector<16x256xf32>
    %19 = arith.mulf %17, %18 : vector<16x256xf32>
    %20 = vector.extract_strided_slice %14 {offsets = [0, 0], sizes = [16, 256], strides = [1, 1]} : vector<16x512xf32> to vector<16x256xf32>
    %21 = vector.extract_strided_slice %14 {offsets = [0, 256], sizes = [16, 256], strides = [1, 1]} : vector<16x512xf32> to vector<16x256xf32>
    %22 = arith.maximumf %20, %21 : vector<16x256xf32>
    %cst_2 = arith.constant 1.000000e+00 : f32
    %23 = vector.broadcast %cst_2 : f32 to vector<16x256xf32>
    %24 = arith.mulf %22, %23 : vector<16x256xf32>
    %cst_3 = arith.constant dense<0xFF800000> : vector<16xf32>
    %25 = vector.multi_reduction <maximumf>, %24, %cst_3 [1] : vector<16x256xf32> to vector<16xf32>
    %26 = vector.shape_cast %25 : vector<16xf32> to vector<16x1xf32>
    %cst_4 = arith.constant dense<0xFF800000> : vector<16xf32>
    %27 = vector.multi_reduction <maximumf>, %19, %cst_4 [1] : vector<16x256xf32> to vector<16xf32>
    %28 = vector.shape_cast %27 : vector<16xf32> to vector<16x1xf32>
    %cst_5 = arith.constant dense<0xFF800000> : vector<16xf32>
    %29 = vector.multi_reduction <maximumf>, %11, %cst_5 [1] : vector<16x256xf32> to vector<16xf32>
    %30 = vector.shape_cast %29 : vector<16xf32> to vector<16x1xf32>
    %c0_6 = arith.constant 0 : index
    %c0_7 = arith.constant 0 : index
    %31 = vector.load %arg2[%c0_6, %c0_7] : memref<3x12xf32, #tpu.memory_space<vmem>>, vector<3x12xf32>
    %c0_8 = arith.constant 0 : index
    %c0_9 = arith.constant 0 : index
    %32 = vector.load %arg3[%c0_8, %c0_9] : memref<3x12xf32, #tpu.memory_space<vmem>>, vector<3x12xf32>
    %33 = vector.extract_strided_slice %31 {offsets = [0, 0], sizes = [1, 12], strides = [1, 1]} : vector<3x12xf32> to vector<1x12xf32>
    %34 = vector.broadcast %26 : vector<16x1xf32> to vector<16x12xf32>
    %35 = vector.broadcast %33 : vector<1x12xf32> to vector<16x12xf32>
    %36 = arith.mulf %34, %35 : vector<16x12xf32>
    %37 = vector.extract_strided_slice %31 {offsets = [1, 0], sizes = [1, 12], strides = [1, 1]} : vector<3x12xf32> to vector<1x12xf32>
    %38 = vector.broadcast %28 : vector<16x1xf32> to vector<16x12xf32>
    %39 = vector.broadcast %37 : vector<1x12xf32> to vector<16x12xf32>
    %40 = arith.mulf %38, %39 : vector<16x12xf32>
    %41 = arith.addf %36, %40 : vector<16x12xf32>
    %42 = vector.extract_strided_slice %31 {offsets = [2, 0], sizes = [1, 12], strides = [1, 1]} : vector<3x12xf32> to vector<1x12xf32>
    %43 = vector.broadcast %30 : vector<16x1xf32> to vector<16x12xf32>
    %44 = vector.broadcast %42 : vector<1x12xf32> to vector<16x12xf32>
    %45 = arith.mulf %43, %44 : vector<16x12xf32>
    %46 = arith.addf %41, %45 : vector<16x12xf32>
    %cst_10 = arith.constant 0.000000e+00 : f32
    %47 = vector.broadcast %cst_10 : f32 to vector<16x12xf32>
    %48 = arith.maximumf %46, %47 : vector<16x12xf32>
    %49 = vector.extract_strided_slice %32 {offsets = [0, 0], sizes = [1, 12], strides = [1, 1]} : vector<3x12xf32> to vector<1x12xf32>
    %50 = vector.broadcast %49 : vector<1x12xf32> to vector<16x12xf32>
    %51 = arith.mulf %48, %50 : vector<16x12xf32>
    %cst_11 = arith.constant dense<0.000000e+00> : vector<16xf32>
    %52 = vector.multi_reduction <add>, %51, %cst_11 [1] : vector<16x12xf32> to vector<16xf32>
    %53 = vector.shape_cast %52 : vector<16xf32> to vector<16x1xf32>
    %54 = arith.negf %53 : vector<16x1xf32>
    %55 = math.exp %54 : vector<16x1xf32>
    %cst_12 = arith.constant 1.000000e+00 : f32
    %56 = vector.broadcast %cst_12 : f32 to vector<16x1xf32>
    %57 = arith.addf %56, %55 : vector<16x1xf32>
    %58 = arith.divf %56, %57 : vector<16x1xf32>
    %59 = math.exp %58 : vector<16x1xf32>
    %60 = vector.extract_strided_slice %32 {offsets = [1, 0], sizes = [1, 12], strides = [1, 1]} : vector<3x12xf32> to vector<1x12xf32>
    %61 = vector.broadcast %60 : vector<1x12xf32> to vector<16x12xf32>
    %62 = arith.mulf %48, %61 : vector<16x12xf32>
    %cst_13 = arith.constant dense<0.000000e+00> : vector<16xf32>
    %63 = vector.multi_reduction <add>, %62, %cst_13 [1] : vector<16x12xf32> to vector<16xf32>
    %64 = vector.shape_cast %63 : vector<16xf32> to vector<16x1xf32>
    %65 = arith.negf %64 : vector<16x1xf32>
    %66 = math.exp %65 : vector<16x1xf32>
    %cst_14 = arith.constant 1.000000e+00 : f32
    %67 = vector.broadcast %cst_14 : f32 to vector<16x1xf32>
    %68 = arith.addf %67, %66 : vector<16x1xf32>
    %69 = arith.divf %67, %68 : vector<16x1xf32>
    %70 = math.exp %69 : vector<16x1xf32>
    %71 = vector.extract_strided_slice %32 {offsets = [2, 0], sizes = [1, 12], strides = [1, 1]} : vector<3x12xf32> to vector<1x12xf32>
    %72 = vector.broadcast %71 : vector<1x12xf32> to vector<16x12xf32>
    %73 = arith.mulf %48, %72 : vector<16x12xf32>
    %cst_15 = arith.constant dense<0.000000e+00> : vector<16xf32>
    %74 = vector.multi_reduction <add>, %73, %cst_15 [1] : vector<16x12xf32> to vector<16xf32>
    %75 = vector.shape_cast %74 : vector<16xf32> to vector<16x1xf32>
    %76 = arith.negf %75 : vector<16x1xf32>
    %77 = math.exp %76 : vector<16x1xf32>
    %cst_16 = arith.constant 1.000000e+00 : f32
    %78 = vector.broadcast %cst_16 : f32 to vector<16x1xf32>
    %79 = arith.addf %78, %77 : vector<16x1xf32>
    %80 = arith.divf %78, %79 : vector<16x1xf32>
    %81 = math.exp %80 : vector<16x1xf32>
    %82 = arith.addf %59, %70 : vector<16x1xf32>
    %83 = arith.addf %82, %81 : vector<16x1xf32>
    %cst_17 = arith.constant 1.000000e+00 : f32
    %84 = vector.broadcast %cst_17 : f32 to vector<16x1xf32>
    %85 = arith.divf %84, %83 : vector<16x1xf32>
    %86 = arith.mulf %59, %85 : vector<16x1xf32>
    %87 = vector.broadcast %86 : vector<16x1xf32> to vector<16x256xf32>
    %88 = arith.mulf %24, %87 : vector<16x256xf32>
    %89 = arith.mulf %70, %85 : vector<16x1xf32>
    %90 = vector.broadcast %89 : vector<16x1xf32> to vector<16x256xf32>
    %91 = arith.mulf %19, %90 : vector<16x256xf32>
    %92 = arith.addf %88, %91 : vector<16x256xf32>
    %93 = arith.mulf %81, %85 : vector<16x1xf32>
    %94 = vector.broadcast %93 : vector<16x1xf32> to vector<16x256xf32>
    %95 = arith.mulf %11, %94 : vector<16x256xf32>
    %96 = arith.addf %92, %95 : vector<16x256xf32>
    %c0_18 = arith.constant 0 : index
    %c0_19 = arith.constant 0 : index
    %97 = vector.load %arg4[%c0_18, %c0_19] : memref<256x128xf32, #tpu.memory_space<vmem>>, vector<256x128xf32>
    %cst_20 = arith.constant dense<0.000000e+00> : vector<16x128xf32>
    %98 = tpu.matmul %96, %97, %cst_20 {dimension_numbers = #tpu.dot_dimension_numbers<[1], [0], [0], [1], [0, 0, 1, 1], [], []>} : vector<16x256xf32>, vector<256x128xf32>, vector<16x128xf32> -> vector<16x128xf32>
    %c0_21 = arith.constant 0 : index
    %c0_22 = arith.constant 0 : index
    %99 = vector.load %arg5[%c0_21, %c0_22] : memref<1x128xf32, #tpu.memory_space<vmem>>, vector<1x128xf32>
    %100 = vector.broadcast %99 : vector<1x128xf32> to vector<16x128xf32>
    %101 = arith.addf %98, %100 : vector<16x128xf32>
    %c0_23 = arith.constant 0 : index
    %c0_24 = arith.constant 0 : index
    %102 = vector.load %arg6[%c0_23, %c0_24] : memref<16x128xf32, #tpu.memory_space<vmem>>, vector<16x128xf32>
    tpu.vector_store %arg6[%c0_23, %c0_24], %101 {strides = array<i32>} : memref<16x128xf32, #tpu.memory_space<vmem>>, vector<16x128xf32>,
    return
  }
  func.func @transform_0(%arg0: i32) -> (i32, i32) {
    %c0_i32 = arith.constant 0 : i32
    %c0_i32_0 = arith.constant 0 : i32
    return %arg0, %c0_i32 : i32, i32
  }
  func.func @transform_1(%arg0: i32) -> (i32, i32) {
    %c0_i32 = arith.constant 0 : i32
    %c0_i32_0 = arith.constant 0 : i32
    %c0_i32_1 = arith.constant 0 : i32
    return %c0_i32, %c0_i32_0 : i32, i32
  }
  func.func @transform_2(%arg0: i32) -> (i32, i32) {
    %c0_i32 = arith.constant 0 : i32
    %c0_i32_0 = arith.constant 0 : i32
    %c0_i32_1 = arith.constant 0 : i32
    return %c0_i32, %c0_i32_0 : i32, i32
  }
  func.func @transform_3(%arg0: i32) -> (i32, i32) {
    %c0_i32 = arith.constant 0 : i32
    %c0_i32_0 = arith.constant 0 : i32
    %c0_i32_1 = arith.constant 0 : i32
    return %c0_i32, %c0_i32_0 : i32, i32
  }
  func.func @transform_4(%arg0: i32) -> (i32, i32) {
    %c0_i32 = arith.constant 0 : i32
    %c0_i32_0 = arith.constant 0 : i32
    %c0_i32_1 = arith.constant 0 : i32
    return %c0_i32, %c0_i32_0 : i32, i32
  }
  func.func @transform_5(%arg0: i32) -> (i32, i32) {
    %c0_i32 = arith.constant 0 : i32
    %c0_i32_0 = arith.constant 0 : i32
    return %arg0, %c0_i32 : i32, i32
  }
}

</mosaic_0001>

<llo_original>
// kernel: tpu_custom_call.1
$region0: #{tpu_custom_call.1}
  #allocation0 [shape = 'u32[]', space=smem, size = 0x4, offset = 0x4, fixed_abs, tag = 'smem constant byte address 0x4 - core index']
  #allocation1 [shape = 'u32[144,128]{1,0:T(1,128)}', space=vmem, size = 0x12000, scoped, tag = 'internal scratch']
  %s0 = inlined_call_operand.hbm [shape: f32[16,2048], index: 0, kind: input, shape index: {}]
  %s1 = inlined_call_operand.hbm [shape: f32[3,12], index: 1, kind: input, shape index: {}]
  %s2 = inlined_call_operand.vmem [shape: f32[3,12], index: 2, kind: input, shape index: {}]
  %s3 = inlined_call_operand.hbm [shape: f32[256,128], index: 3, kind: input, shape index: {}]
  %s4 = inlined_call_operand.vmem [shape: f32[1,128], index: 4, kind: input, shape index: {}]
  %s5 = inlined_call_operand.hbm [shape: f32[16,128], index: 5, kind: output, shape index: {}]
  %s6 = sld [smem:[#allocation0]]
  $region42: #{tpu_custom_call.1} parent=0
    _
  %s8 = ssub.s32 1, %s6
  %s9 = scalar_select 0, %s8, %s6
  $region1: #{tpu_custom_call.1} parent=0
    #allocation2 [shape = 'u8[131072]{0}', space=vmem, size = 0x20000, scoped, tag = 'input window, operand 0, single buffered']
    #allocation3 [shape = 's32[1]{0}', space=sflag, size = 0x4, scoped, tag = 'scoped memory for tpu_custom_call.1']
    #allocation4 [shape = 's32[1]{0}', space=sflag, size = 0x4, scoped, tag = 'scoped memory for tpu_custom_call.1']
    #allocation5 [shape = 'u8[2048]{0}', space=vmem, size = 0x800, scoped, tag = 'input window, operand 1, single buffered']
    #allocation6 [shape = 's32[1]{0}', space=sflag, size = 0x4, scoped, tag = 'scoped memory for tpu_custom_call.1']
    #allocation7 [shape = 'u8[131072]{0}', space=vmem, size = 0x20000, scoped, tag = 'input window, operand 3, single buffered']
    #allocation8 [shape = 'u8[8192]{0}', space=vmem, size = 0x2000, scoped, tag = 'output window, operand 0, single buffered']
    %10 = vsyncpa [#allocation3], 0
    %11 = vsyncpa [#allocation6], 0
    %12 = vsyncpa [#allocation4], 0
    // Predicated region
    $region2: #{tpu_custom_call.1} parent=1 // pred_check
      _
    $region3: #{tpu_custom_call.1} parent=1 // pred_check_branch
      %14 = sbr.rel (0) target = $region5
    $region4: #{tpu_custom_call.1} parent=1 // pred_region
      %s16 = ssub.s32 4096, 4096
      %17 = vsyncadd [#allocation3], %s16
      %s18 = sshll.u32 [#allocation2], 4
      %s19 = int_to_ptr.vmem [resolvable:$true] %s18
      %24 = dma.hbm_to_vmem [thread:$0]  %s0, 4096, %s19, [#allocation3], 2048, 2048, 128
    $region5: #{tpu_custom_call.1} parent=1 // pred_fallthru
      _
    // Predicated region
    $region6: #{tpu_custom_call.1} parent=1 // pred_check
      _
    $region7: #{tpu_custom_call.1} parent=1 // pred_check_branch
      %26 = sbr.rel (0) target = $region9
    $region8: #{tpu_custom_call.1} parent=1 // pred_region
      %s28 = ssub.s32 64, 64
      %29 = vsyncadd [#allocation6], %s28
      %s31 = sshll.u32 [#allocation5], 4
      %s32 = int_to_ptr.vmem [resolvable:$true] %s31
      %34 = dma.hbm_to_vmem [thread:$0]  %s1, 64, %s32, [#allocation6]
    $region9: #{tpu_custom_call.1} parent=1 // pred_fallthru
      _
    // Predicated region
    $region10: #{tpu_custom_call.1} parent=1 // pred_check
      _
    $region11: #{tpu_custom_call.1} parent=1 // pred_check_branch
      %36 = sbr.rel (0) target = $region13
    $region12: #{tpu_custom_call.1} parent=1 // pred_region
      _
    $region13: #{tpu_custom_call.1} parent=1 // pred_fallthru
      _
    // Predicated region
    $region14: #{tpu_custom_call.1} parent=1 // pred_check
      _
    $region15: #{tpu_custom_call.1} parent=1 // pred_check_branch
      %38 = sbr.rel (0) target = $region17
    $region16: #{tpu_custom_call.1} parent=1 // pred_region
      %s40 = ssub.s32 4096, 4096
      %41 = vsyncadd [#allocation6], %s40
      %s42 = sshll.u32 [#allocation7], 4
      %s43 = int_to_ptr.vmem [resolvable:$true] %s42
      %48 = dma.hbm_to_vmem [thread:$0]  %s3, 4096, %s43, [#allocation6], 128, 128, 8
    $region17: #{tpu_custom_call.1} parent=1 // pred_fallthru
      _
    // Predicated region
    $region18: #{tpu_custom_call.1} parent=1 // pred_check
      _
    $region19: #{tpu_custom_call.1} parent=1 // pred_check_branch
      %50 = sbr.rel (0) target = $region21
    $region20: #{tpu_custom_call.1} parent=1 // pred_region
      _
    $region21: #{tpu_custom_call.1} parent=1 // pred_fallthru
      _
    // Predicated region
    $region22: #{tpu_custom_call.1} parent=1 // pred_check
      _
    $region23: #{tpu_custom_call.1} parent=1 // pred_check_branch
      %52 = sbr.rel (0) target = $region25
    $region24: #{tpu_custom_call.1} parent=1 // pred_region
      %53 = dma.done [#allocation3], 4096
    $region25: #{tpu_custom_call.1} parent=1 // pred_fallthru
      _
    // Predicated region
    $region26: #{tpu_custom_call.1} parent=1 // pred_check
      _
    $region27: #{tpu_custom_call.1} parent=1 // pred_check_branch
      %55 = sbr.rel (0) target = $region29
    $region28: #{tpu_custom_call.1} parent=1 // pred_region
      %56 = dma.done [#allocation6], 64
    $region29: #{tpu_custom_call.1} parent=1 // pred_fallthru
      _
    // Predicated region
    $region30: #{tpu_custom_call.1} parent=1 // pred_check
      _
    $region31: #{tpu_custom_call.1} parent=1 // pred_check_branch
      %58 = sbr.rel (0) target = $region33
    $region32: #{tpu_custom_call.1} parent=1 // pred_region
      %59 = dma.done [#allocation6], 4096
    $region33: #{tpu_custom_call.1} parent=1 // pred_fallthru
      _
    %v60 = vld [vmem:[#allocation2] sm:$0xff]
    %v61 = vld [vmem:[#allocation2 + $0x8] sm:$0xff]
    %v62 = vld [vmem:[#allocation2 + $0x10] sm:$0xff]
    %v63 = vld [vmem:[#allocation2 + $0x18] sm:$0xff]
    %v64 = vld [vmem:[#allocation2 + $0x20] sm:$0xff]
    %v65 = vld [vmem:[#allocation2 + $0x28] sm:$0xff]
    %v66 = vld [vmem:[#allocation2 + $0x30] sm:$0xff]
    %v67 = vld [vmem:[#allocation2 + $0x38] sm:$0xff]
    %v68 = vld [vmem:[#allocation2 + $0x40] sm:$0xff]
    %v69 = vld [vmem:[#allocation2 + $0x48] sm:$0xff]
    %v70 = vld [vmem:[#allocation2 + $0x50] sm:$0xff]
    %v71 = vld [vmem:[#allocation2 + $0x58] sm:$0xff]
    %v72 = vld [vmem:[#allocation2 + $0x60] sm:$0xff]
    %v73 = vld [vmem:[#allocation2 + $0x68] sm:$0xff]
    %v74 = vld [vmem:[#allocation2 + $0x70] sm:$0xff]
    %v75 = vld [vmem:[#allocation2 + $0x78] sm:$0xff]
    %v76 = vld [vmem:[#allocation2 + $0x80] sm:$0xff]
    %v77 = vld [vmem:[#allocation2 + $0x88] sm:$0xff]
    %v78 = vld [vmem:[#allocation2 + $0x90] sm:$0xff]
    %v79 = vld [vmem:[#allocation2 + $0x98] sm:$0xff]
    %v80 = vld [vmem:[#allocation2 + $0xa0] sm:$0xff]
    %v81 = vld [vmem:[#allocation2 + $0xa8] sm:$0xff]
    %v82 = vld [vmem:[#allocation2 + $0xb0] sm:$0xff]
    %v83 = vld [vmem:[#allocation2 + $0xb8] sm:$0xff]
    %v84 = vld [vmem:[#allocation2 + $0xc0] sm:$0xff]
    %v85 = vld [vmem:[#allocation2 + $0xc8] sm:$0xff]
    %v86 = vld [vmem:[#allocation2 + $0xd0] sm:$0xff]
    %v87 = vld [vmem:[#allocation2 + $0xd8] sm:$0xff]
    %v88 = vld [vmem:[#allocation2 + $0xe0] sm:$0xff]
    %v89 = vld [vmem:[#allocation2 + $0xe8] sm:$0xff]
    %v90 = vld [vmem:[#allocation2 + $0xf0] sm:$0xff]
    %v91 = vld [vmem:[#allocation2 + $0xf8] sm:$0xff]
    %v92 = vmax.f32 %v60, %v68
    %v93 = vmax.f32 %v61, %v69
    %v94 = vmax.f32 %v62, %v70
    %v95 = vmax.f32 %v63, %v71
    %v96 = vmax.f32 %v64, %v72
    %v97 = vmax.f32 %v65, %v73
    %v98 = vmax.f32 %v66, %v74
    %v99 = vmax.f32 %v67, %v75
    %v100 = vmax.f32 %v76, %v84
    %v101 = vmax.f32 %v77, %v85
    %v102 = vmax.f32 %v78, %v86
    %v103 = vmax.f32 %v79, %v87
    %v104 = vmax.f32 %v80, %v88
    %v105 = vmax.f32 %v81, %v89
    %v106 = vmax.f32 %v82, %v90
    %v107 = vmax.f32 %v83, %v91
    %v108 = vadd.f32 %v92, %v96
    %v109 = vadd.f32 %v93, %v97
    %v110 = vadd.f32 %v94, %v98
    %v111 = vadd.f32 %v95, %v99
    %v112 = vadd.f32 %v100, %v104
    %v113 = vadd.f32 %v101, %v105
    %v114 = vadd.f32 %v102, %v106
    %v115 = vadd.f32 %v103, %v107
    %v116 = vadd.f32 %v108, %v110
    %v117 = vadd.f32 %v109, %v111
    %v118 = vadd.f32 %v112, %v114
    %v119 = vadd.f32 %v113, %v115
    %v120 = vmul.f32 %v116, 0.25
    %v121 = vmul.f32 %v117, 0.25
    %v122 = vmul.f32 %v118, 0.25
    %v123 = vmul.f32 %v119, 0.25
    %v124 = vmax.f32 %v92, %v96
    %v125 = vmax.f32 %v93, %v97
    %v126 = vmax.f32 %v94, %v98
    %v127 = vmax.f32 %v95, %v99
    %v128 = vmax.f32 %v100, %v104
    %v129 = vmax.f32 %v101, %v105
    %v130 = vmax.f32 %v102, %v106
    %v131 = vmax.f32 %v103, %v107
    %v132 = vadd.f32 %v124, %v126
    %v133 = vadd.f32 %v125, %v127
    %v134 = vadd.f32 %v128, %v130
    %v135 = vadd.f32 %v129, %v131
    %v136 = vmul.f32 %v132, 0.5
    %v137 = vmul.f32 %v133, 0.5
    %v138 = vmul.f32 %v134, 0.5
    %v139 = vmul.f32 %v135, 0.5
    %v140 = vmax.f32 %v124, %v126
    %v141 = vmax.f32 %v125, %v127
    %v142 = vmax.f32 %v128, %v130
    %v143 = vmax.f32 %v129, %v131
    %v144 = vmax.f32 %v140, %v141
    %145 = vmax.xlane.f32.xlu0 %v144
    %v146 = vpop.xlane.xlu0 %145
    %v147 = vmax.f32 %v142, %v143
    %148 = vmax.xlane.f32.xlu0 %v147
    %v149 = vpop.xlane.xlu0 %148
    %v150 = vmax.f32 %v136, %v137
    %151 = vmax.xlane.f32.xlu0 %v150
    %v152 = vpop.xlane.xlu0 %151
    %v153 = vmax.f32 %v138, %v139
    %154 = vmax.xlane.f32.xlu0 %v153
    %v155 = vpop.xlane.xlu0 %154
    %v156 = vmax.f32 %v120, %v121
    %157 = vmax.xlane.f32.xlu0 %v156
    %v158 = vpop.xlane.xlu0 %157
    %v159 = vmax.f32 %v122, %v123
    %160 = vmax.xlane.f32.xlu0 %v159
    %v161 = vpop.xlane.xlu0 %160
    %v162 = vld [vmem:[#allocation5] sm:$0x7]
    %v163 = vld [vmem:[%s2] sm:$0x7]
    %v164 = vlaneseq
    %v165 = vshrl.u32 %v164, 7
    %v166 = vsub.s32 0, %v165
    %v167 = vrot.slane %v162, %v166
    %v168 = vmul.f32 %v146, %v167
    %v169 = vmul.f32 %v149, %v167
    %v170 = vlaneseq
    %v171 = vshrl.u32 %v170, 7
    %v172 = vsub.s32 1, %v171
    %v173 = vrot.slane %v162, %v172
    %v174 = vmul.f32 %v152, %v173
    %v175 = vmul.f32 %v155, %v173
    %v176 = vadd.f32 %v168, %v174
    %v177 = vadd.f32 %v169, %v175
    %v178 = vlaneseq
    %v179 = vshrl.u32 %v178, 7
    %v180 = vsub.s32 2, %v179
    %v181 = vrot.slane %v162, %v180
    %v182 = vmul.f32 %v158, %v181
    %v183 = vmul.f32 %v161, %v181
    %v184 = vadd.f32 %v176, %v182
    %v185 = vadd.f32 %v177, %v183
    %v186 = vmax.f32 %v184, 0.0
    %v187 = vmax.f32 %v185, 0.0
    %v188 = vlaneseq
    %v189 = vshrl.u32 %v188, 7
    %v190 = vsub.s32 0, %v189
    %v191 = vrot.slane %v163, %v190
    %v192 = vmul.f32 %v186, %v191
    %v193 = vmul.f32 %v187, %v191
    %vm194 = vcmask 97280
    %v195 = vsel %vm194, %v192, 0.0
    %196 = vadd.xlane.f32.xlu0 %v195
    %v197 = vpop.xlane.xlu0 %196
    %v198 = vsel %vm194, %v193, 0.0
    %199 = vadd.xlane.f32.xlu0 %v198
    %v200 = vpop.xlane.xlu0 %199
    %v201 = vxor.u32 %v197, 2147483648
    %v202 = vxor.u32 %v200, 2147483648
    %v203 = vmul.f32 %v201, 1.442695
    %v204 = vpow.pop %v203
    %v205 = vmul.f32 %v202, 1.442695
    %v206 = vpow.pop %v205
    %v207 = vadd.f32 %v204, 1.0
    %v208 = vadd.f32 %v206, 1.0
    %v209 = vrcp.pop %v207
    %v210 = vmul.f32 1.0, %v209
    %v211 = vrcp.pop %v208
    %v212 = vmul.f32 1.0, %v211
    %v213 = vmul.f32 %v210, 1.442695
    %v214 = vpow.pop %v213
    %v215 = vmul.f32 %v212, 1.442695
    %v216 = vpow.pop %v215
    %v217 = vlaneseq
    %v218 = vshrl.u32 %v217, 7
    %v219 = vsub.s32 1, %v218
    %v220 = vrot.slane %v163, %v219
    %v221 = vmul.f32 %v186, %v220
    %v222 = vmul.f32 %v187, %v220
    %v223 = vsel %vm194, %v221, 0.0
    %224 = vadd.xlane.f32.xlu0 %v223
    %v225 = vpop.xlane.xlu0 %224
    %v226 = vsel %vm194, %v222, 0.0
    %227 = vadd.xlane.f32.xlu0 %v226
    %v228 = vpop.xlane.xlu0 %227
    %v229 = vxor.u32 %v225, 2147483648
    %v230 = vxor.u32 %v228, 2147483648
    %v231 = vmul.f32 %v229, 1.442695
    %v232 = vpow.pop %v231
    %v233 = vmul.f32 %v230, 1.442695
    %v234 = vpow.pop %v233
    %v235 = vadd.f32 %v232, 1.0
    %v236 = vadd.f32 %v234, 1.0
    %v237 = vrcp.pop %v235
    %v238 = vmul.f32 1.0, %v237
    %v239 = vrcp.pop %v236
    %v240 = vmul.f32 1.0, %v239
    %v241 = vmul.f32 %v238, 1.442695
    %v242 = vpow.pop %v241
    %v243 = vmul.f32 %v240, 1.442695
    %v244 = vpow.pop %v243
    %v245 = vlaneseq
    %v246 = vshrl.u32 %v245, 7
    %v247 = vsub.s32 2, %v246
    %v248 = vrot.slane %v163, %v247
    %v249 = vmul.f32 %v186, %v248
    %v250 = vmul.f32 %v187, %v248
    %v251 = vsel %vm194, %v249, 0.0
    %252 = vadd.xlane.f32.xlu0 %v251
    %v253 = vpop.xlane.xlu0 %252
    %v254 = vsel %vm194, %v250, 0.0
    %255 = vadd.xlane.f32.xlu0 %v254
    %v256 = vpop.xlane.xlu0 %255
    %v257 = vxor.u32 %v253, 2147483648
    %v258 = vxor.u32 %v256, 2147483648
    %v259 = vmul.f32 %v257, 1.442695
    %v260 = vpow.pop %v259
    %v261 = vmul.f32 %v258, 1.442695
    %v262 = vpow.pop %v261
    %v263 = vadd.f32 %v260, 1.0
    %v264 = vadd.f32 %v262, 1.0
    %v265 = vrcp.pop %v263
    %v266 = vmul.f32 1.0, %v265
    %v267 = vrcp.pop %v264
    %v268 = vmul.f32 1.0, %v267
    %v269 = vmul.f32 %v266, 1.442695
    %v270 = vpow.pop %v269
    %v271 = vmul.f32 %v268, 1.442695
    %v272 = vpow.pop %v271
    %v273 = vadd.f32 %v214, %v242
    %v274 = vadd.f32 %v216, %v244
    %v275 = vadd.f32 %v273, %v270
    %v276 = vadd.f32 %v274, %v272
    %v277 = vrcp.pop %v275
    %v278 = vmul.f32 1.0, %v277
    %v279 = vrcp.pop %v276
    %v280 = vmul.f32 1.0, %v279
    %v281 = vmul.f32 %v214, %v278
    %v282 = vmul.f32 %v216, %v280
    %v283 = vmul.f32 %v140, %v281
    %v284 = vmul.f32 %v141, %v281
    %v285 = vmul.f32 %v142, %v282
    %v286 = vmul.f32 %v143, %v282
    %v287 = vmul.f32 %v242, %v278
    %v288 = vmul.f32 %v244, %v280
    %v289 = vmul.f32 %v136, %v287
    %v290 = vmul.f32 %v137, %v287
    %v291 = vmul.f32 %v138, %v288
    %v292 = vmul.f32 %v139, %v288
    %v293 = vadd.f32 %v283, %v289
    %v294 = vadd.f32 %v284, %v290
    %v295 = vadd.f32 %v285, %v291
    %v296 = vadd.f32 %v286, %v292
    %v297 = vmul.f32 %v270, %v278
    %v298 = vmul.f32 %v272, %v280
    %v299 = vmul.f32 %v120, %v297
    %v300 = vmul.f32 %v121, %v297
    %v301 = vmul.f32 %v122, %v298
    %v302 = vmul.f32 %v123, %v298
    %v303 = vadd.f32 %v293, %v299
    %v304 = vadd.f32 %v294, %v300
    %v305 = vadd.f32 %v295, %v301
    %v306 = vadd.f32 %v296, %v302
    %v307 = vld [vmem:[#allocation7] sm:$0xff]
    %v308 = vld [vmem:[#allocation7 + $0x8] sm:$0xff]
    %v309 = vld [vmem:[#allocation7 + $0x10] sm:$0xff]
    %v310 = vld [vmem:[#allocation7 + $0x18] sm:$0xff]
    %v311 = vld [vmem:[#allocation7 + $0x20] sm:$0xff]
    %v312 = vld [vmem:[#allocation7 + $0x28] sm:$0xff]
    %v313 = vld [vmem:[#allocation7 + $0x30] sm:$0xff]
    %v314 = vld [vmem:[#allocation7 + $0x38] sm:$0xff]
    %v315 = vld [vmem:[#allocation7 + $0x40] sm:$0xff]
    %v316 = vld [vmem:[#allocation7 + $0x48] sm:$0xff]
    %v317 = vld [vmem:[#allocation7 + $0x50] sm:$0xff]
    %v318 = vld [vmem:[#allocation7 + $0x58] sm:$0xff]
    %v319 = vld [vmem:[#allocation7 + $0x60] sm:$0xff]
    %v320 = vld [vmem:[#allocation7 + $0x68] sm:$0xff]
    %v321 = vld [vmem:[#allocation7 + $0x70] sm:$0xff]
    %v322 = vld [vmem:[#allocation7 + $0x78] sm:$0xff]
    %v323 = vld [vmem:[#allocation7 + $0x80] sm:$0xff]
    %v324 = vld [vmem:[#allocation7 + $0x88] sm:$0xff]
    %v325 = vld [vmem:[#allocation7 + $0x90] sm:$0xff]
    %v326 = vld [vmem:[#allocation7 + $0x98] sm:$0xff]
    %v327 = vld [vmem:[#allocation7 + $0xa0] sm:$0xff]
    %v328 = vld [vmem:[#allocation7 + $0xa8] sm:$0xff]
    %v329 = vld [vmem:[#allocation7 + $0xb0] sm:$0xff]
    %v330 = vld [vmem:[#allocation7 + $0xb8] sm:$0xff]
    %v331 = vld [vmem:[#allocation7 + $0xc0] sm:$0xff]
    %v332 = vld [vmem:[#allocation7 + $0xc8] sm:$0xff]
    %v333 = vld [vmem:[#allocation7 + $0xd0] sm:$0xff]
    %v334 = vld [vmem:[#allocation7 + $0xd8] sm:$0xff]
    %v335 = vld [vmem:[#allocation7 + $0xe0] sm:$0xff]
    %v336 = vld [vmem:[#allocation7 + $0xe8] sm:$0xff]
    %v337 = vld [vmem:[#allocation7 + $0xf0] sm:$0xff]
    %v338 = vld [vmem:[#allocation7 + $0xf8] sm:$0xff]
    %v339 = vld [vmem:[%s4] sm:$0x1]
    %v341 = vlaneseq
    %v342 = vshrl.u32 %v341, 7
    %v343 = vsub.s32 0, %v342
    %v344 = vrot.slane %v339, %v343
    %346 = vmatprep.subr.mxu0 0.0
    %347 = vmatpush1.msra.mxu0 %v307
    %348 = vmatprep.subr.mxu0 0.0
    %349 = vmatpush1.msra.mxu0 %v308
    %350 = vmatprep.subr.mxu0 0.0
    %351 = vmatpush1.msra.mxu0 %v309
    %352 = vmatprep.subr.mxu0 0.0
    %353 = vmatpush1.msra.mxu0 %v310
    %354 = vmatprep.subr.mxu0 0.0
    %355 = vmatpush1.msra.mxu0 %v311
    %356 = vmatprep.subr.mxu0 0.0
    %357 = vmatpush1.msra.mxu0 %v312
    %358 = vmatprep.subr.mxu0 0.0
    %359 = vmatpush1.msra.mxu0 %v313
    %360 = vmatprep.subr.mxu0 0.0
    %361 = vmatpush1.msra.mxu0 %v314
    %362 = vmatprep.subr.mxu0 0.0
    %363 = vmatpush1.msra.mxu0 %v315
    %364 = vmatprep.subr.mxu0 0.0
    %365 = vmatpush1.msra.mxu0 %v316
    %366 = vmatprep.subr.mxu0 0.0
    %367 = vmatpush1.msra.mxu0 %v317
    %368 = vmatprep.subr.mxu0 0.0
    %369 = vmatpush1.msra.mxu0 %v318
    %370 = vmatprep.subr.mxu0 0.0
    %371 = vmatpush1.msra.mxu0 %v319
    %372 = vmatprep.subr.mxu0 0.0
    %373 = vmatpush1.msra.mxu0 %v320
    %374 = vmatprep.subr.mxu0 0.0
    %375 = vmatpush1.msra.mxu0 %v321
    %376 = vmatprep.subr.mxu0 0.0
    %377 = vmatpush1.msra.mxu0 %v322
    %378 = vmatprep.subr.mxu0 0.0
    %379 = vmatpush1.msra.mxu0 %v323
    %380 = vmatprep.subr.mxu0 0.0
    %381 = vmatpush1.msra.mxu0 %v324
    %382 = vmatprep.subr.mxu0 0.0
    %383 = vmatpush1.msra.mxu0 %v325
    %384 = vmatprep.subr.mxu0 0.0
    %385 = vmatpush1.msra.mxu0 %v326
    %386 = vmatprep.subr.mxu0 0.0
    %387 = vmatpush1.msra.mxu0 %v327
    %388 = vmatprep.subr.mxu0 0.0
    %389 = vmatpush1.msra.mxu0 %v328
    %390 = vmatprep.subr.mxu0 0.0
    %391 = vmatpush1.msra.mxu0 %v329
    %392 = vmatprep.subr.mxu0 0.0
    %393 = vmatpush1.msra.mxu0 %v330
    %394 = vmatprep.subr.mxu0 0.0
    %395 = vmatpush1.msra.mxu0 %v331
    %396 = vmatprep.subr.mxu0 0.0
    %397 = vmatpush1.msra.mxu0 %v332
    %398 = vmatprep.subr.mxu0 0.0
    %399 = vmatpush1.msra.mxu0 %v333
    %400 = vmatprep.subr.mxu0 0.0
    %401 = vmatpush1.msra.mxu0 %v334
    %402 = vmatprep.subr.mxu0 0.0
    %403 = vmatpush1.msra.mxu0 %v335
    %404 = vmatprep.subr.mxu0 0.0
    %405 = vmatpush1.msra.mxu0 %v336
    %406 = vmatprep.subr.mxu0 0.0
    %407 = vmatpush1.msra.mxu0 %v337
    %408 = vmatprep.subr.mxu0 0.0
    %409 = vmatpush1.msra.mxu0 %v338
    %410 = vmatprep.mubr.f32.mxu0 %v304
    %411 = vmatmul.mubr.f32.gmra.mrb[0].mxu0 %v303
    %v412 = vpop.f32.mrb[0].mxu0
    %v413 = vadd.f32 %v344, %v412
    %v414 = vpop.f32.mrb[0].mxu0
    %415 = vmatprep.mubr.f32.mxu0 %v306
    %416 = vmatmul.mubr.f32.gmra.mrb[0].mxu0 %v305
    %v417 = vpop.f32.mrb[0].mxu0
    %v418 = vadd.f32 %v344, %v417
    %v419 = vpop.f32.mrb[0].mxu0
    %420 = vdwg.mxu0
    %421 = vst [vmem:[#allocation8] sm:$0xff] %v413
    %422 = vst [vmem:[#allocation8 + $0x8] sm:$0xff] %v418
    // Predicated region
    $region34: #{tpu_custom_call.1} parent=1 // pred_check
      _
    $region35: #{tpu_custom_call.1} parent=1 // pred_check_branch
      %424 = sbr.rel (0) target = $region37
    $region36: #{tpu_custom_call.1} parent=1 // pred_region
      %s426 = ssub.s32 256, 256
      %427 = vsyncadd [#allocation4], %s426
      %s428 = sshll.u32 [#allocation8], 4
      %s429 = int_to_ptr.vmem [resolvable:$true] %s428
      %434 = dma.vmem_to_hbm [thread:$0]  %s429, 256, %s5, [#allocation4], 128, 128, 8
    $region37: #{tpu_custom_call.1} parent=1 // pred_fallthru
      _
    // Predicated region
    $region38: #{tpu_custom_call.1} parent=1 // pred_check
      _
    $region39: #{tpu_custom_call.1} parent=1 // pred_check_branch
      %436 = sbr.rel (0) target = $region41
    $region40: #{tpu_custom_call.1} parent=1 // pred_region
      %437 = dma.done [#allocation4], 256
    $region41: #{tpu_custom_call.1} parent=1 // pred_fallthru
      _
    %438 = vsyncpa [#allocation3], 1
    %439 = vsyncpa [#allocation6], 1
    %440 = vsyncpa [#allocation4], 1

// kernel: tpu_custom_call.1
$region0: #{tpu_custom_call.1}
  #allocation0 [shape = 'u32[]', space=smem, size = 0x4, offset = 0x4, fixed_abs, tag = 'smem constant byte address 0x4 - core index']
  #allocation1 [shape = 'u32[144,128]{1,0:T(1,128)}', space=vmem, size = 0x12000, scoped, tag = 'internal scratch']
  %s0 = inlined_call_operand.hbm [shape: f32[16,2048], index: 0, kind: input, shape index: {}]
  %s1 = inlined_call_operand.hbm [shape: f32[3,12], index: 1, kind: input, shape index: {}]
  %s2 = inlined_call_operand.vmem [shape: f32[3,12], index: 2, kind: input, shape index: {}]
  %s3 = inlined_call_operand.hbm [shape: f32[256,128], index: 3, kind: input, shape index: {}]
  %s4 = inlined_call_operand.vmem [shape: f32[1,128], index: 4, kind: input, shape index: {}]
  %s5 = inlined_call_operand.hbm [shape: f32[16,128], index: 5, kind: output, shape index: {}]
  %s6 = sld [smem:[#allocation0]]
  $region42: #{tpu_custom_call.1} parent=0
    _
  %s8 = ssub.s32 1, %s6
  %s9 = scalar_select 0, %s8, %s6
  $region1: #{tpu_custom_call.1} parent=0
    #allocation2 [shape = 'u8[131072]{0}', space=vmem, size = 0x20000, scoped, tag = 'input window, operand 0, single buffered']
    #allocation3 [shape = 's32[1]{0}', space=sflag, size = 0x4, scoped, tag = 'scoped memory for tpu_custom_call.1']
    #allocation4 [shape = 's32[1]{0}', space=sflag, size = 0x4, scoped, tag = 'scoped memory for tpu_custom_call.1']
    #allocation5 [shape = 'u8[2048]{0}', space=vmem, size = 0x800, scoped, tag = 'input window, operand 1, single buffered']
    #allocation6 [shape = 's32[1]{0}', space=sflag, size = 0x4, scoped, tag = 'scoped memory for tpu_custom_call.1']
    #allocation7 [shape = 'u8[131072]{0}', space=vmem, size = 0x20000, scoped, tag = 'input window, operand 3, single buffered']
    #allocation8 [shape = 'u8[8192]{0}', space=vmem, size = 0x2000, scoped, tag = 'output window, operand 0, single buffered']
    %10 = vsyncpa [#allocation3], 0
    %11 = vsyncpa [#allocation6], 0
    %12 = vsyncpa [#allocation4], 0
    // Predicated region
    $region2: #{tpu_custom_call.1} parent=1 // pred_check
      _
    $region3: #{tpu_custom_call.1} parent=1 // pred_check_branch
      %14 = sbr.rel (0) target = $region5
    $region4: #{tpu_custom_call.1} parent=1 // pred_region
      %s16 = ssub.s32 4096, 4096
      %17 = vsyncadd [#allocation3], %s16
      %s18 = sshll.u32 [#allocation2], 4
      %s19 = int_to_ptr.vmem [resolvable:$true] %s18
      %24 = dma.hbm_to_vmem [thread:$0]  %s0, 4096, %s19, [#allocation3], 2048, 2048, 128
    $region5: #{tpu_custom_call.1} parent=1 // pred_fallthru
      _
    // Predicated region
    $region6: #{tpu_custom_call.1} parent=1 // pred_check
      _
    $region7: #{tpu_custom_call.1} parent=1 // pred_check_branch
      %26 = sbr.rel (0) target = $region9
    $region8: #{tpu_custom_call.1} parent=1 // pred_region
      %s28 = ssub.s32 64, 64
      %29 = vsyncadd [#allocation6], %s28
      %s31 = sshll.u32 [#allocation5], 4
      %s32 = int_to_ptr.vmem [resolvable:$true] %s31
      %34 = dma.hbm_to_vmem [thread:$0]  %s1, 64, %s32, [#allocation6]
    $region9: #{tpu_custom_call.1} parent=1 // pred_fallthru
      _
    // Predicated region
    $region10: #{tpu_custom_call.1} parent=1 // pred_check
      _
    $region11: #{tpu_custom_call.1} parent=1 // pred_check_branch
      %36 = sbr.rel (0) target = $region13
    $region12: #{tpu_custom_call.1} parent=1 // pred_region
      _
    $region13: #{tpu_custom_call.1} parent=1 // pred_fallthru
      _
    // Predicated region
    $region14: #{tpu_custom_call.1} parent=1 // pred_check
      _
    $region15: #{tpu_custom_call.1} parent=1 // pred_check_branch
      %38 = sbr.rel (0) target = $region17
    $region16: #{tpu_custom_call.1} parent=1 // pred_region
      %s40 = ssub.s32 4096, 4096
      %41 = vsyncadd [#allocation6], %s40
      %s42 = sshll.u32 [#allocation7], 4
      %s43 = int_to_ptr.vmem [resolvable:$true] %s42
      %48 = dma.hbm_to_vmem [thread:$0]  %s3, 4096, %s43, [#allocation6], 128, 128, 8
    $region17: #{tpu_custom_call.1} parent=1 // pred_fallthru
      _
    // Predicated region
    $region18: #{tpu_custom_call.1} parent=1 // pred_check
      _
    $region19: #{tpu_custom_call.1} parent=1 // pred_check_branch
      %50 = sbr.rel (0) target = $region21
    $region20: #{tpu_custom_call.1} parent=1 // pred_region
      _
    $region21: #{tpu_custom_call.1} parent=1 // pred_fallthru
      _
    // Predicated region
    $region22: #{tpu_custom_call.1} parent=1 // pred_check
      _
    $region23: #{tpu_custom_call.1} parent=1 // pred_check_branch
      %52 = sbr.rel (0) target = $region25
    $region24: #{tpu_custom_call.1} parent=1 // pred_region
      %53 = dma.done [#allocation3], 4096
    $region25: #{tpu_custom_call.1} parent=1 // pred_fallthru
      _
    // Predicated region
    $region26: #{tpu_custom_call.1} parent=1 // pred_check
      _
    $region27: #{tpu_custom_call.1} parent=1 // pred_check_branch
      %55 = sbr.rel (0) target = $region29
    $region28: #{tpu_custom_call.1} parent=1 // pred_region
      %56 = dma.done [#allocation6], 64
    $region29: #{tpu_custom_call.1} parent=1 // pred_fallthru
      _
    // Predicated region
    $region30: #{tpu_custom_call.1} parent=1 // pred_check
      _
    $region31: #{tpu_custom_call.1} parent=1 // pred_check_branch
      %58 = sbr.rel (0) target = $region33
    $region32: #{tpu_custom_call.1} parent=1 // pred_region
      %59 = dma.done [#allocation6], 4096
    $region33: #{tpu_custom_call.1} parent=1 // pred_fallthru
      _
    %v60 = vld [vmem:[#allocation2] sm:$0xff]
    %v61 = vld [vmem:[#allocation2 + $0x8] sm:$0xff]
    %v62 = vld [vmem:[#allocation2 + $0x10] sm:$0xff]
    %v63 = vld [vmem:[#allocation2 + $0x18] sm:$0xff]
    %v64 = vld [vmem:[#allocation2 + $0x20] sm:$0xff]
    %v65 = vld [vmem:[#allocation2 + $0x28] sm:$0xff]
    %v66 = vld [vmem:[#allocation2 + $0x30] sm:$0xff]
    %v67 = vld [vmem:[#allocation2 + $0x38] sm:$0xff]
    %v68 = vld [vmem:[#allocation2 + $0x40] sm:$0xff]
    %v69 = vld [vmem:[#allocation2 + $0x48] sm:$0xff]
    %v70 = vld [vmem:[#allocation2 + $0x50] sm:$0xff]
    %v71 = vld [vmem:[#allocation2 + $0x58] sm:$0xff]
    %v72 = vld [vmem:[#allocation2 + $0x60] sm:$0xff]
    %v73 = vld [vmem:[#allocation2 + $0x68] sm:$0xff]
    %v74 = vld [vmem:[#allocation2 + $0x70] sm:$0xff]
    %v75 = vld [vmem:[#allocation2 + $0x78] sm:$0xff]
    %v76 = vld [vmem:[#allocation2 + $0x80] sm:$0xff]
    %v77 = vld [vmem:[#allocation2 + $0x88] sm:$0xff]
    %v78 = vld [vmem:[#allocation2 + $0x90] sm:$0xff]
    %v79 = vld [vmem:[#allocation2 + $0x98] sm:$0xff]
    %v80 = vld [vmem:[#allocation2 + $0xa0] sm:$0xff]
    %v81 = vld [vmem:[#allocation2 + $0xa8] sm:$0xff]
    %v82 = vld [vmem:[#allocation2 + $0xb0] sm:$0xff]
    %v83 = vld [vmem:[#allocation2 + $0xb8] sm:$0xff]
    %v84 = vld [vmem:[#allocation2 + $0xc0] sm:$0xff]
    %v85 = vld [vmem:[#allocation2 + $0xc8] sm:$0xff]
    %v86 = vld [vmem:[#allocation2 + $0xd0] sm:$0xff]
    %v87 = vld [vmem:[#allocation2 + $0xd8] sm:$0xff]
    %v88 = vld [vmem:[#allocation2 + $0xe0] sm:$0xff]
    %v89 = vld [vmem:[#allocation2 + $0xe8] sm:$0xff]
    %v90 = vld [vmem:[#allocation2 + $0xf0] sm:$0xff]
    %v91 = vld [vmem:[#allocation2 + $0xf8] sm:$0xff]
    %v92 = vmax.f32 %v60, %v68
    %v93 = vmax.f32 %v61, %v69
    %v94 = vmax.f32 %v62, %v70
    %v95 = vmax.f32 %v63, %v71
    %v96 = vmax.f32 %v64, %v72
    %v97 = vmax.f32 %v65, %v73
    %v98 = vmax.f32 %v66, %v74
    %v99 = vmax.f32 %v67, %v75
    %v100 = vmax.f32 %v76, %v84
    %v101 = vmax.f32 %v77, %v85
    %v102 = vmax.f32 %v78, %v86
    %v103 = vmax.f32 %v79, %v87
    %v104 = vmax.f32 %v80, %v88
    %v105 = vmax.f32 %v81, %v89
    %v106 = vmax.f32 %v82, %v90
    %v107 = vmax.f32 %v83, %v91
    %v108 = vadd.f32 %v92, %v96
    %v109 = vadd.f32 %v93, %v97
    %v110 = vadd.f32 %v94, %v98
    %v111 = vadd.f32 %v95, %v99
    %v112 = vadd.f32 %v100, %v104
    %v113 = vadd.f32 %v101, %v105
    %v114 = vadd.f32 %v102, %v106
    %v115 = vadd.f32 %v103, %v107
    %v116 = vadd.f32 %v108, %v110
    %v117 = vadd.f32 %v109, %v111
    %v118 = vadd.f32 %v112, %v114
    %v119 = vadd.f32 %v113, %v115
    %v120 = vmul.f32 %v116, 0.25
    %v121 = vmul.f32 %v117, 0.25
    %v122 = vmul.f32 %v118, 0.25
    %v123 = vmul.f32 %v119, 0.25
    %v124 = vmax.f32 %v92, %v96
    %v125 = vmax.f32 %v93, %v97
    %v126 = vmax.f32 %v94, %v98
    %v127 = vmax.f32 %v95, %v99
    %v128 = vmax.f32 %v100, %v104
    %v129 = vmax.f32 %v101, %v105
    %v130 = vmax.f32 %v102, %v106
    %v131 = vmax.f32 %v103, %v107
    %v132 = vadd.f32 %v124, %v126
    %v133 = vadd.f32 %v125, %v127
    %v134 = vadd.f32 %v128, %v130
    %v135 = vadd.f32 %v129, %v131
    %v136 = vmul.f32 %v132, 0.5
    %v137 = vmul.f32 %v133, 0.5
    %v138 = vmul.f32 %v134, 0.5
    %v139 = vmul.f32 %v135, 0.5
    %v140 = vmax.f32 %v124, %v126
    %v141 = vmax.f32 %v125, %v127
    %v142 = vmax.f32 %v128, %v130
    %v143 = vmax.f32 %v129, %v131
    %v144 = vmax.f32 %v140, %v141
    %145 = vmax.xlane.f32.xlu0 %v144
    %v146 = vpop.xlane.xlu0 %145
    %v147 = vmax.f32 %v142, %v143
    %148 = vmax.xlane.f32.xlu0 %v147
    %v149 = vpop.xlane.xlu0 %148
    %v150 = vmax.f32 %v136, %v137
    %151 = vmax.xlane.f32.xlu0 %v150
    %v152 = vpop.xlane.xlu0 %151
    %v153 = vmax.f32 %v138, %v139
    %154 = vmax.xlane.f32.xlu0 %v153
    %v155 = vpop.xlane.xlu0 %154
    %v156 = vmax.f32 %v120, %v121
    %157 = vmax.xlane.f32.xlu0 %v156
    %v158 = vpop.xlane.xlu0 %157
    %v159 = vmax.f32 %v122, %v123
    %160 = vmax.xlane.f32.xlu0 %v159
    %v161 = vpop.xlane.xlu0 %160
    %v162 = vld [vmem:[#allocation5] sm:$0x7]
    %v163 = vld [vmem:[%s2] sm:$0x7]
    %v164 = vlaneseq
    %v165 = vshrl.u32 %v164, 7
    %v166 = vsub.s32 0, %v165
    %v167 = vrot.slane %v162, %v166
    %v168 = vmul.f32 %v146, %v167
    %v169 = vmul.f32 %v149, %v167
    %v170 = vlaneseq
    %v171 = vshrl.u32 %v170, 7
    %v172 = vsub.s32 1, %v171
    %v173 = vrot.slane %v162, %v172
    %v174 = vmul.f32 %v152, %v173
    %v175 = vmul.f32 %v155, %v173
    %v176 = vadd.f32 %v168, %v174
    %v177 = vadd.f32 %v169, %v175
    %v178 = vlaneseq
    %v179 = vshrl.u32 %v178, 7
    %v180 = vsub.s32 2, %v179
    %v181 = vrot.slane %v162, %v180
    %v182 = vmul.f32 %v158, %v181
    %v183 = vmul.f32 %v161, %v181
    %v184 = vadd.f32 %v176, %v182
    %v185 = vadd.f32 %v177, %v183
    %v186 = vmax.f32 %v184, 0.0
    %v187 = vmax.f32 %v185, 0.0
    %v188 = vlaneseq
    %v189 = vshrl.u32 %v188, 7
    %v190 = vsub.s32 0, %v189
    %v191 = vrot.slane %v163, %v190
    %v192 = vmul.f32 %v186, %v191
    %v193 = vmul.f32 %v187, %v191
    %vm194 = vcmask 97280
    %v195 = vsel %vm194, %v192, 0.0
    %196 = vadd.xlane.f32.xlu0 %v195
    %v197 = vpop.xlane.xlu0 %196
    %v198 = vsel %vm194, %v193, 0.0
    %199 = vadd.xlane.f32.xlu0 %v198
    %v200 = vpop.xlane.xlu0 %199
    %v201 = vxor.u32 %v197, 2147483648
    %v202 = vxor.u32 %v200, 2147483648
    %v203 = vmul.f32 %v201, 1.442695
    %v204 = vpow.pop %v203
    %v205 = vmul.f32 %v202, 1.442695
    %v206 = vpow.pop %v205
    %v207 = vadd.f32 %v204, 1.0
    %v208 = vadd.f32 %v206, 1.0
    %v209 = vrcp.pop %v207
    %v210 = vmul.f32 1.0, %v209
    %v211 = vrcp.pop %v208
    %v212 = vmul.f32 1.0, %v211
    %v213 = vmul.f32 %v210, 1.442695
    %v214 = vpow.pop %v213
    %v215 = vmul.f32 %v212, 1.442695
    %v216 = vpow.pop %v215
    %v217 = vlaneseq
    %v218 = vshrl.u32 %v217, 7
    %v219 = vsub.s32 1, %v218
    %v220 = vrot.slane %v163, %v219
    %v221 = vmul.f32 %v186, %v220
    %v222 = vmul.f32 %v187, %v220
    %v223 = vsel %vm194, %v221, 0.0
    %224 = vadd.xlane.f32.xlu0 %v223
    %v225 = vpop.xlane.xlu0 %224
    %v226 = vsel %vm194, %v222, 0.0
    %227 = vadd.xlane.f32.xlu0 %v226
    %v228 = vpop.xlane.xlu0 %227
    %v229 = vxor.u32 %v225, 2147483648
    %v230 = vxor.u32 %v228, 2147483648
    %v231 = vmul.f32 %v229, 1.442695
    %v232 = vpow.pop %v231
    %v233 = vmul.f32 %v230, 1.442695
    %v234 = vpow.pop %v233
    %v235 = vadd.f32 %v232, 1.0
    %v236 = vadd.f32 %v234, 1.0
    %v237 = vrcp.pop %v235
    %v238 = vmul.f32 1.0, %v237
    %v239 = vrcp.pop %v236
    %v240 = vmul.f32 1.0, %v239
    %v241 = vmul.f32 %v238, 1.442695
    %v242 = vpow.pop %v241
    %v243 = vmul.f32 %v240, 1.442695
    %v244 = vpow.pop %v243
    %v245 = vlaneseq
    %v246 = vshrl.u32 %v245, 7
    %v247 = vsub.s32 2, %v246
    %v248 = vrot.slane %v163, %v247
    %v249 = vmul.f32 %v186, %v248
    %v250 = vmul.f32 %v187, %v248
    %v251 = vsel %vm194, %v249, 0.0
    %252 = vadd.xlane.f32.xlu0 %v251
    %v253 = vpop.xlane.xlu0 %252
    %v254 = vsel %vm194, %v250, 0.0
    %255 = vadd.xlane.f32.xlu0 %v254
    %v256 = vpop.xlane.xlu0 %255
    %v257 = vxor.u32 %v253, 2147483648
    %v258 = vxor.u32 %v256, 2147483648
    %v259 = vmul.f32 %v257, 1.442695
    %v260 = vpow.pop %v259
    %v261 = vmul.f32 %v258, 1.442695
    %v262 = vpow.pop %v261
    %v263 = vadd.f32 %v260, 1.0
    %v264 = vadd.f32 %v262, 1.0
    %v265 = vrcp.pop %v263
    %v266 = vmul.f32 1.0, %v265
    %v267 = vrcp.pop %v264
    %v268 = vmul.f32 1.0, %v267
    %v269 = vmul.f32 %v266, 1.442695
    %v270 = vpow.pop %v269
    %v271 = vmul.f32 %v268, 1.442695
    %v272 = vpow.pop %v271
    %v273 = vadd.f32 %v214, %v242
    %v274 = vadd.f32 %v216, %v244
    %v275 = vadd.f32 %v273, %v270
    %v276 = vadd.f32 %v274, %v272
    %v277 = vrcp.pop %v275
    %v278 = vmul.f32 1.0, %v277
    %v279 = vrcp.pop %v276
    %v280 = vmul.f32 1.0, %v279
    %v281 = vmul.f32 %v214, %v278
    %v282 = vmul.f32 %v216, %v280
    %v283 = vmul.f32 %v140, %v281
    %v284 = vmul.f32 %v141, %v281
    %v285 = vmul.f32 %v142, %v282
    %v286 = vmul.f32 %v143, %v282
    %v287 = vmul.f32 %v242, %v278
    %v288 = vmul.f32 %v244, %v280
    %v289 = vmul.f32 %v136, %v287
    %v290 = vmul.f32 %v137, %v287
    %v291 = vmul.f32 %v138, %v288
    %v292 = vmul.f32 %v139, %v288
    %v293 = vadd.f32 %v283, %v289
    %v294 = vadd.f32 %v284, %v290
    %v295 = vadd.f32 %v285, %v291
    %v296 = vadd.f32 %v286, %v292
    %v297 = vmul.f32 %v270, %v278
    %v298 = vmul.f32 %v272, %v280
    %v299 = vmul.f32 %v120, %v297
    %v300 = vmul.f32 %v121, %v297
    %v301 = vmul.f32 %v122, %v298
    %v302 = vmul.f32 %v123, %v298
    %v303 = vadd.f32 %v293, %v299
    %v304 = vadd.f32 %v294, %v300
    %v305 = vadd.f32 %v295, %v301
    %v306 = vadd.f32 %v296, %v302
    %v307 = vld [vmem:[#allocation7] sm:$0xff]
    %v308 = vld [vmem:[#allocation7 + $0x8] sm:$0xff]
    %v309 = vld [vmem:[#allocation7 + $0x10] sm:$0xff]
    %v310 = vld [vmem:[#allocation7 + $0x18] sm:$0xff]
    %v311 = vld [vmem:[#allocation7 + $0x20] sm:$0xff]
    %v312 = vld [vmem:[#allocation7 + $0x28] sm:$0xff]
    %v313 = vld [vmem:[#allocation7 + $0x30] sm:$0xff]
    %v314 = vld [vmem:[#allocation7 + $0x38] sm:$0xff]
    %v315 = vld [vmem:[#allocation7 + $0x40] sm:$0xff]
    %v316 = vld [vmem:[#allocation7 + $0x48] sm:$0xff]
    %v317 = vld [vmem:[#allocation7 + $0x50] sm:$0xff]
    %v318 = vld [vmem:[#allocation7 + $0x58] sm:$0xff]
    %v319 = vld [vmem:[#allocation7 + $0x60] sm:$0xff]
    %v320 = vld [vmem:[#allocation7 + $0x68] sm:$0xff]
    %v321 = vld [vmem:[#allocation7 + $0x70] sm:$0xff]
    %v322 = vld [vmem:[#allocation7 + $0x78] sm:$0xff]
    %v323 = vld [vmem:[#allocation7 + $0x80] sm:$0xff]
    %v324 = vld [vmem:[#allocation7 + $0x88] sm:$0xff]
    %v325 = vld [vmem:[#allocation7 + $0x90] sm:$0xff]
    %v326 = vld [vmem:[#allocation7 + $0x98] sm:$0xff]
    %v327 = vld [vmem:[#allocation7 + $0xa0] sm:$0xff]
    %v328 = vld [vmem:[#allocation7 + $0xa8] sm:$0xff]
    %v329 = vld [vmem:[#allocation7 + $0xb0] sm:$0xff]
    %v330 = vld [vmem:[#allocation7 + $0xb8] sm:$0xff]
    %v331 = vld [vmem:[#allocation7 + $0xc0] sm:$0xff]
    %v332 = vld [vmem:[#allocation7 + $0xc8] sm:$0xff]
    %v333 = vld [vmem:[#allocation7 + $0xd0] sm:$0xff]
    %v334 = vld [vmem:[#allocation7 + $0xd8] sm:$0xff]
    %v335 = vld [vmem:[#allocation7 + $0xe0] sm:$0xff]
    %v336 = vld [vmem:[#allocation7 + $0xe8] sm:$0xff]
    %v337 = vld [vmem:[#allocation7 + $0xf0] sm:$0xff]
    %v338 = vld [vmem:[#allocation7 + $0xf8] sm:$0xff]
    %v339 = vld [vmem:[%s4] sm:$0x1]
    %v341 = vlaneseq
    %v342 = vshrl.u32 %v341, 7
    %v343 = vsub.s32 0, %v342
    %v344 = vrot.slane %v339, %v343
    %346 = vmatprep.subr.mxu0 0.0
    %347 = vmatpush1.msra.mxu0 %v307
    %348 = vmatprep.subr.mxu0 0.0
    %349 = vmatpush1.msra.mxu0 %v308
    %350 = vmatprep.subr.mxu0 0.0
    %351 = vmatpush1.msra.mxu0 %v309
    %352 = vmatprep.subr.mxu0 0.0
    %353 = vmatpush1.msra.mxu0 %v310
    %354 = vmatprep.subr.mxu0 0.0
    %355 = vmatpush1.msra.mxu0 %v311
    %356 = vmatprep.subr.mxu0 0.0
    %357 = vmatpush1.msra.mxu0 %v312
    %358 = vmatprep.subr.mxu0 0.0
    %359 = vmatpush1.msra.mxu0 %v313
    %360 = vmatprep.subr.mxu0 0.0
    %361 = vmatpush1.msra.mxu0 %v314
    %362 = vmatprep.subr.mxu0 0.0
    %363 = vmatpush1.msra.mxu0 %v315
    %364 = vmatprep.subr.mxu0 0.0
    %365 = vmatpush1.msra.mxu0 %v316
    %366 = vmatprep.subr.mxu0 0.0
    %367 = vmatpush1.msra.mxu0 %v317
    %368 = vmatprep.subr.mxu0 0.0
    %369 = vmatpush1.msra.mxu0 %v318
    %370 = vmatprep.subr.mxu0 0.0
    %371 = vmatpush1.msra.mxu0 %v319
    %372 = vmatprep.subr.mxu0 0.0
    %373 = vmatpush1.msra.mxu0 %v320
    %374 = vmatprep.subr.mxu0 0.0
    %375 = vmatpush1.msra.mxu0 %v321
    %376 = vmatprep.subr.mxu0 0.0
    %377 = vmatpush1.msra.mxu0 %v322
    %378 = vmatprep.subr.mxu0 0.0
    %379 = vmatpush1.msra.mxu0 %v323
    %380 = vmatprep.subr.mxu0 0.0
    %381 = vmatpush1.msra.mxu0 %v324
    %382 = vmatprep.subr.mxu0 0.0
    %383 = vmatpush1.msra.mxu0 %v325
    %384 = vmatprep.subr.mxu0 0.0
    %385 = vmatpush1.msra.mxu0 %v326
    %386 = vmatprep.subr.mxu0 0.0
    %387 = vmatpush1.msra.mxu0 %v327
    %388 = vmatprep.subr.mxu0 0.0
    %389 = vmatpush1.msra.mxu0 %v328
    %390 = vmatprep.subr.mxu0 0.0
    %391 = vmatpush1.msra.mxu0 %v329
    %392 = vmatprep.subr.mxu0 0.0
    %393 = vmatpush1.msra.mxu0 %v330
    %394 = vmatprep.subr.mxu0 0.0
    %395 = vmatpush1.msra.mxu0 %v331
    %396 = vmatprep.subr.mxu0 0.0
    %397 = vmatpush1.msra.mxu0 %v332
    %398 = vmatprep.subr.mxu0 0.0
    %399 = vmatpush1.msra.mxu0 %v333
    %400 = vmatprep.subr.mxu0 0.0
    %401 = vmatpush1.msra.mxu0 %v334
    %402 = vmatprep.subr.mxu0 0.0
    %403 = vmatpush1.msra.mxu0 %v335
    %404 = vmatprep.subr.mxu0 0.0
    %405 = vmatpush1.msra.mxu0 %v336
    %406 = vmatprep.subr.mxu0 0.0
    %407 = vmatpush1.msra.mxu0 %v337
    %408 = vmatprep.subr.mxu0 0.0
    %409 = vmatpush1.msra.mxu0 %v338
    %410 = vmatprep.mubr.f32.mxu0 %v304
    %411 = vmatmul.mubr.f32.gmra.mrb[0].mxu0 %v303
    %v412 = vpop.f32.mrb[0].mxu0
    %v413 = vadd.f32 %v344, %v412
    %v414 = vpop.f32.mrb[0].mxu0
    %415 = vmatprep.mubr.f32.mxu0 %v306
    %416 = vmatmul.mubr.f32.gmra.mrb[0].mxu0 %v305
    %v417 = vpop.f32.mrb[0].mxu0
    %v418 = vadd.f32 %v344, %v417
    %v419 = vpop.f32.mrb[0].mxu0
    %420 = vdwg.mxu0
    %421 = vst [vmem:[#allocation8] sm:$0xff] %v413
    %422 = vst [vmem:[#allocation8 + $0x8] sm:$0xff] %v418
    // Predicated region
    $region34: #{tpu_custom_call.1} parent=1 // pred_check
      _
    $region35: #{tpu_custom_call.1} parent=1 // pred_check_branch
      %424 = sbr.rel (0) target = $region37
    $region36: #{tpu_custom_call.1} parent=1 // pred_region
      %s426 = ssub.s32 256, 256
      %427 = vsyncadd [#allocation4], %s426
      %s428 = sshll.u32 [#allocation8], 4
      %s429 = int_to_ptr.vmem [resolvable:$true] %s428
      %434 = dma.vmem_to_hbm [thread:$0]  %s429, 256, %s5, [#allocation4], 128, 128, 8
    $region37: #{tpu_custom_call.1} parent=1 // pred_fallthru
      _
    // Predicated region
    $region38: #{tpu_custom_call.1} parent=1 // pred_check
      _
    $region39: #{tpu_custom_call.1} parent=1 // pred_check_branch
      %436 = sbr.rel (0) target = $region41
    $region40: #{tpu_custom_call.1} parent=1 // pred_region
      %437 = dma.done [#allocation4], 256
    $region41: #{tpu_custom_call.1} parent=1 // pred_fallthru
      _
    %438 = vsyncpa [#allocation3], 1
    %439 = vsyncpa [#allocation6], 1
    %440 = vsyncpa [#allocation4], 1

</llo_original>
